<compile_context>
chip_gen: v6e
topology: v6e:2x2x1
jax: 0.10.0
libtpu: 0.0.40
codegen_flags: <defaults>
</compile_context>

<pallas_src>
import jax
import jax.numpy as jnp
from jax.experimental import pallas as pl
from jax.experimental.pallas import tpu as pltpu


def _mlp_tile(x, w1, b1, w2, b2, w3, b3):
    """(Cin, T) f32 pixels-on-lanes tile -> (Cout, T) f32.

    Weight dtypes drive MXU precision: bf16 weights => bf16 MXU operands with f32
    accumulation; f32 weights => plain f32 math.
    """
    cin = x.shape[0]
    if cin <= 8:
        # Small-K first layer on the VPU: unrolled broadcast multiply-adds (skip MXU).
        h = w1[:, 0:1].astype(jnp.float32) * x[0:1, :]
        for c in range(1, cin):
            h = h + w1[:, c:c + 1].astype(jnp.float32) * x[c:c + 1, :]
        h = h + b1
    else:
        h = jnp.dot(w1, x.astype(w1.dtype), preferred_element_type=jnp.float32) + b1
    h = jnp.maximum(h, 0.0)

    h = jnp.dot(w2, h.astype(w2.dtype), preferred_element_type=jnp.float32) + b2
    h = jnp.maximum(h, 0.0)

    z = jnp.dot(w3, h.astype(w3.dtype), preferred_element_type=jnp.float32) + b3

    # Softplus with PyTorch's default threshold=20 (identity when z > 20), then +1e-6.
    sp = jnp.where(z > 20.0, z, jnp.log1p(jnp.exp(jnp.minimum(z, 20.0))))
    return sp + 1e-6


def hypanet_kernel(x_ref, w1_ref, b1_ref, w2_ref, b2_ref, w3_ref, b3_ref, o_ref):
    # x_ref: (1, Cin, k*Pb);  o_ref: (k, Cout, Pb).  Flat (per-image) path is k == 1.
    k, _, pb = o_ref.shape
    y = _mlp_tile(x_ref[0], w1_ref[...], b1_ref[...], w2_ref[...], b2_ref[...],
                  w3_ref[...], b3_ref[...])
    for i in range(k):  # static unroll; 128-aligned lane slices, no cross-lane shuffles
        o_ref[i] = y[:, i * pb:(i + 1) * pb].astype(o_ref.dtype)


def hypanet_forward(x_nchw, params, *, tm=8192, use_bf16=True):
    """x_nchw: (N, in_nc, H, W) float32 -> (N, out_nc, H, W) float32."""
    w1, b1, w2, b2, w3, b3 = params          # w*: (out, in); b*: (out,)
    N, Cin, H, W = x_nchw.shape
    chan = w1.shape[0]
    Cout = w3.shape[0]
    P = H * W
    P128 = pl.cdiv(P, 128) * 128             # per-image pixel count, lane aligned
    tm_req = max(128, (int(tm) // 128) * 128)

    # bf16 MXU operands (accumulation stays f32 in-kernel). Layer 1 stays f32 when it
    # runs on the VPU (Cin <= 8).
    if use_bf16:
        w1c = w1 if Cin <= 8 else w1.astype(jnp.bfloat16)
        w2c = w2.astype(jnp.bfloat16)
        w3c = w3.astype(jnp.bfloat16)
    else:
        w1c, w2c, w3c = w1, w2, w3
    b1r = b1.reshape(chan, 1).astype(jnp.float32)
    b2r = b2.reshape(chan, 1).astype(jnp.float32)
    b3r = b3.reshape(Cout, 1).astype(jnp.float32)

    x3 = x_nchw.astype(jnp.float32).reshape(N, Cin, P)

    def _weight_specs(const_map):
        return [
            pl.BlockSpec((chan, Cin), const_map),     # w1
            pl.BlockSpec((chan, 1), const_map),       # b1
            pl.BlockSpec((chan, chan), const_map),    # w2
            pl.BlockSpec((chan, 1), const_map),       # b2
            pl.BlockSpec((Cout, chan), const_map),    # w3
            pl.BlockSpec((Cout, 1), const_map),       # b3
        ]

    vmem_cap = 32 * 1024 * 1024  # safe on all generations; raises v5e's 16 MiB default
    collapse = (Cin == 1) and (N > 1) and (P128 < tm_req)

    if collapse:
        # Collapse batch into the pixel/lane axis and pack k images per tile.
        if P128 != P:
            x3 = jnp.pad(x3, ((0, 0), (0, 0), (0, P128 - P)))
        x_c = x3.reshape(1, 1, N * P128)              # free: Cin == 1, contiguous
        k = max(1, min(tm_req // P128, N))
        if pl.cdiv(N, k) < 2:                          # keep >= 2 grid steps (v7x megacore)
            k = pl.cdiv(N, 2)
        grid = (pl.cdiv(N, k),)
        out3d = pl.pallas_call(
            hypanet_kernel,
            out_shape=jax.ShapeDtypeStruct((N, Cout, P128), jnp.float32),
            grid_spec=pltpu.PrefetchScalarGridSpec(
                num_scalar_prefetch=0,
                grid=grid,
                in_specs=[pl.BlockSpec((1, 1, k * P128), lambda j: (0, 0, j))]
                + _weight_specs(lambda j: (0, 0)),
                out_specs=pl.BlockSpec((k, Cout, P128), lambda j: (j, 0, 0)),
            ),
            compiler_params=pltpu.CompilerParams(
                dimension_semantics=("parallel",),
                vmem_limit_bytes=vmem_cap,
            ),
        )(x_c, w1c, b1r, w2c, b2r, w3c, b3r)
        if P128 != P:
            # Only taken for small, non-128-multiple images -> negligible slice cost.
            out3d = out3d[:, :, :P]
    else:
        # Flat per-image path: big lane tiles, partial boundary blocks, no padding.
        tm_eff = min(tm_req, (P // 128) * 128) if P >= 128 else P
        grid = (N, pl.cdiv(P, tm_eff))
        out3d = pl.pallas_call(
            hypanet_kernel,
            out_shape=jax.ShapeDtypeStruct((N, Cout, P), jnp.float32),
            grid_spec=pltpu.PrefetchScalarGridSpec(
                num_scalar_prefetch=0,
                grid=grid,
                in_specs=[pl.BlockSpec((1, Cin, tm_eff), lambda n, j: (n, 0, j))]
                + _weight_specs(lambda n, j: (0, 0)),
                out_specs=pl.BlockSpec((1, Cout, tm_eff), lambda n, j: (n, 0, j)),
            ),
            compiler_params=pltpu.CompilerParams(
                dimension_semantics=("parallel", "parallel"),
                vmem_limit_bytes=vmem_cap,
            ),
        )(x3, w1c, b1r, w2c, b2r, w3c, b3r)

    return out3d.reshape(N, Cout, H, W)


def init_params(key, in_nc=1, out_nc=16, channel=64):
    """Deterministic synthetic weights. Conv2d 1x1 weights stored as (out, in)."""
    k1, k2, k3, k4, k5, k6 = jax.random.split(key, 6)
    s1 = 0.5 / (in_nc ** 0.5)
    s2 = 0.5 / (channel ** 0.5)
    w1 = jax.random.normal(k1, (channel, in_nc), jnp.float32) * s1
    b1 = jax.random.normal(k2, (channel,), jnp.float32) * 0.1
    w2 = jax.random.normal(k3, (channel, channel), jnp.float32) * s2
    b2 = jax.random.normal(k4, (channel,), jnp.float32) * 0.1
    w3 = jax.random.normal(k5, (out_nc, channel), jnp.float32) * s2
    b3 = jax.random.normal(k6, (out_nc,), jnp.float32) * 0.1
    return (w1, b1, w2, b2, w3, b3)


def hypanet_ref(x_nchw, params):
    """Pure-JAX f32 reference (same math as the PyTorch module)."""
    w1, b1, w2, b2, w3, b3 = params
    N, Cin, H, W = x_nchw.shape
    hi = jax.lax.Precision.HIGHEST
    x = x_nchw.reshape(N, Cin, H * W)
    h = jnp.maximum(jnp.einsum("oc,ncp->nop", w1, x, precision=hi) + b1[None, :, None], 0.0)
    h = jnp.maximum(jnp.einsum("oc,ncp->nop", w2, h, precision=hi) + b2[None, :, None], 0.0)
    z = jnp.einsum("oc,ncp->nop", w3, h, precision=hi) + b3[None, :, None]
    sp = jnp.where(z > 20.0, z, jnp.log1p(jnp.exp(jnp.minimum(z, 20.0))))
    return (sp + 1e-6).reshape(N, -1, H, W)


if __name__ == "__main__":
    key = jax.random.PRNGKey(0)
    kp, kx1, kx2, kx3, kx4 = jax.random.split(key, 5)

    def check(x, params, tol, **kw):
        out = jax.block_until_ready(hypanet_forward(x, params, **kw))
        ref = hypanet_ref(x, params)
        assert out.shape == ref.shape, (out.shape, ref.shape)
        err = float(jnp.max(jnp.abs(out - ref)))
        assert jnp.allclose(out, ref, atol=tol, rtol=tol), err

    # Module defaults (in_nc=1, out_nc=16, channel=64): collapsed-batch path.
    p_def = init_params(kp, in_nc=1, out_nc=16, channel=64)
    x_a = jax.random.normal(kx1, (2, 1, 16, 16), jnp.float32)
    check(x_a, p_def, 2e-2)                        # bf16 MXU operands (default)
    check(x_a, p_def, 2e-2, use_bf16=False)        # pure-f32 fallback path

    # Non-128-multiple spatial size: per-image pad to 128 + trailing slice.
    x_b = jax.random.normal(kx2, (2, 1, 12, 12), jnp.float32)
    check(x_b, p_def, 2e-2)

    # in_nc=4: flat per-image path, unrolled small-Cin VPU layer 1, partial pixel tile.
    p_c = init_params(kp, in_nc=4, out_nc=16, channel=64)
    x_c = jax.random.normal(kx3, (2, 4, 24, 24), jnp.float32)
    check(x_c, p_c, 2e-2, tm=256)

    # in_nc=32: flat path with a bf16 MXU first layer; P < 128 full-width tile.
    p_d = init_params(kp, in_nc=32, out_nc=16, channel=64)
    x_d = jax.random.normal(kx4, (2, 32, 8, 8), jnp.float32)
    check(x_d, p_d, 2e-2)

    print("KERNEL_OK")
</pallas_src>

<mosaic_0001>
module attributes {stable_mosaic.version = 11 : i64} {
  func.func @hypanet_kernel(%arg0: i32, %arg1: memref<1x1x256xf32, #tpu.memory_space<vmem>>, %arg2: memref<64x1xf32, #tpu.memory_space<vmem>>, %arg3: memref<64x1xf32, #tpu.memory_space<vmem>>, %arg4: memref<64x64xbf16, #tpu.memory_space<vmem>>, %arg5: memref<64x1xf32, #tpu.memory_space<vmem>>, %arg6: memref<16x64xbf16, #tpu.memory_space<vmem>>, %arg7: memref<16x1xf32, #tpu.memory_space<vmem>>, %arg8: memref<1x16x256xf32, #tpu.memory_space<vmem>>) attributes {dimension_semantics = [#tpu.dimension_semantics<parallel>], iteration_bounds = array<i64: 2>, scalar_prefetch = 0 : i64, scratch_operands = 0 : i64, tpu.core_type = #tpu.core_type<tc>, window_params = [{transform_indices = @transform_0, window_bounds = array<i64: 1, 1, 256>}, {pipeline_mode = #tpu.pipeline_mode<synchronous>, transform_indices = @transform_1, window_bounds = array<i64: 64, 1>}, {pipeline_mode = #tpu.pipeline_mode<synchronous>, transform_indices = @transform_2, window_bounds = array<i64: 64, 1>}, {pipeline_mode = #tpu.pipeline_mode<synchronous>, transform_indices = @transform_3, window_bounds = array<i64: 64, 64>}, {pipeline_mode = #tpu.pipeline_mode<synchronous>, transform_indices = @transform_4, window_bounds = array<i64: 64, 1>}, {pipeline_mode = #tpu.pipeline_mode<synchronous>, transform_indices = @transform_5, window_bounds = array<i64: 16, 64>}, {pipeline_mode = #tpu.pipeline_mode<synchronous>, transform_indices = @transform_6, window_bounds = array<i64: 16, 1>}, {transform_indices = @transform_7, window_bounds = array<i64: 1, 16, 256>}]} {
    %c0 = arith.constant 0 : index
    %c0_0 = arith.constant 0 : index
    %c0_1 = arith.constant 0 : index
    %0 = vector.load %arg1[%c0, %c0_0, %c0_1] : memref<1x1x256xf32, #tpu.memory_space<vmem>>, vector<1x1x256xf32>
    %1 = vector.shape_cast %0 : vector<1x1x256xf32> to vector<1x256xf32>
    %c0_2 = arith.constant 0 : index
    %c0_3 = arith.constant 0 : index
    %2 = vector.load %arg2[%c0_2, %c0_3] : memref<64x1xf32, #tpu.memory_space<vmem>>, vector<64x1xf32>
    %c0_4 = arith.constant 0 : index
    %c0_5 = arith.constant 0 : index
    %3 = vector.load %arg3[%c0_4, %c0_5] : memref<64x1xf32, #tpu.memory_space<vmem>>, vector<64x1xf32>
    %c0_6 = arith.constant 0 : index
    %c0_7 = arith.constant 0 : index
    %4 = vector.load %arg4[%c0_6, %c0_7] : memref<64x64xbf16, #tpu.memory_space<vmem>>, vector<64x64xbf16>
    %c0_8 = arith.constant 0 : index
    %c0_9 = arith.constant 0 : index
    %5 = vector.load %arg5[%c0_8, %c0_9] : memref<64x1xf32, #tpu.memory_space<vmem>>, vector<64x1xf32>
    %c0_10 = arith.constant 0 : index
    %c0_11 = arith.constant 0 : index
    %6 = vector.load %arg6[%c0_10, %c0_11] : memref<16x64xbf16, #tpu.memory_space<vmem>>, vector<16x64xbf16>
    %c0_12 = arith.constant 0 : index
    %c0_13 = arith.constant 0 : index
    %7 = vector.load %arg7[%c0_12, %c0_13] : memref<16x1xf32, #tpu.memory_space<vmem>>, vector<16x1xf32>
    %8 = vector.broadcast %2 : vector<64x1xf32> to vector<64x256xf32>
    %9 = vector.broadcast %1 : vector<1x256xf32> to vector<64x256xf32>
    %10 = arith.mulf %8, %9 : vector<64x256xf32>
    %11 = vector.broadcast %3 : vector<64x1xf32> to vector<64x256xf32>
    %12 = arith.addf %10, %11 : vector<64x256xf32>
    %cst = arith.constant 0.000000e+00 : f32
    %13 = vector.broadcast %cst : f32 to vector<64x256xf32>
    %14 = arith.maximumf %12, %13 : vector<64x256xf32>
    %15 = arith.truncf %14 : vector<64x256xf32> to vector<64x256xbf16>
    %cst_14 = arith.constant dense<0.000000e+00> : vector<64x256xf32>
    %16 = tpu.matmul %4, %15, %cst_14 {dimension_numbers = #tpu.dot_dimension_numbers<[1], [0], [0], [1], [0, 0, 1, 1], [], []>} : vector<64x64xbf16>, vector<64x256xbf16>, vector<64x256xf32> -> vector<64x256xf32>
    %17 = vector.broadcast %5 : vector<64x1xf32> to vector<64x256xf32>
    %18 = arith.addf %16, %17 : vector<64x256xf32>
    %cst_15 = arith.constant 0.000000e+00 : f32
    %19 = vector.broadcast %cst_15 : f32 to vector<64x256xf32>
    %20 = arith.maximumf %18, %19 : vector<64x256xf32>
    %21 = arith.truncf %20 : vector<64x256xf32> to vector<64x256xbf16>
    %cst_16 = arith.constant dense<0.000000e+00> : vector<16x256xf32>
    %22 = tpu.matmul %6, %21, %cst_16 {dimension_numbers = #tpu.dot_dimension_numbers<[1], [0], [0], [1], [0, 0, 1, 1], [], []>} : vector<16x64xbf16>, vector<64x256xbf16>, vector<16x256xf32> -> vector<16x256xf32>
    %23 = vector.broadcast %7 : vector<16x1xf32> to vector<16x256xf32>
    %24 = arith.addf %22, %23 : vector<16x256xf32>
    %cst_17 = arith.constant 2.000000e+01 : f32
    %25 = vector.broadcast %cst_17 : f32 to vector<16x256xf32>
    %26 = arith.cmpf ogt, %24, %25 : vector<16x256xf32>
    %cst_18 = arith.constant 2.000000e+01 : f32
    %27 = vector.broadcast %cst_18 : f32 to vector<16x256xf32>
    %28 = arith.minimumf %24, %27 : vector<16x256xf32>
    %29 = math.exp %28 : vector<16x256xf32>
    %30 = math.log1p %29 : vector<16x256xf32>
    %31 = arith.select %26, %24, %30 : vector<16x256xi1>, vector<16x256xf32>
    %cst_19 = arith.constant 9.99999997E-7 : f32
    %32 = vector.broadcast %cst_19 : f32 to vector<16x256xf32>
    %33 = arith.addf %31, %32 : vector<16x256xf32>
    %c0_20 = arith.constant 0 : index
    %c0_21 = arith.constant 0 : index
    %c0_22 = arith.constant 0 : index
    %34 = vector.load %arg8[%c0_20, %c0_21, %c0_22] : memref<1x16x256xf32, #tpu.memory_space<vmem>>, vector<1x16x256xf32>
    %35 = vector.shape_cast %34 : vector<1x16x256xf32> to vector<16x256xf32>
    %36 = vector.shape_cast %33 : vector<16x256xf32> to vector<1x16x256xf32>
    tpu.vector_store %arg8[%c0_20, %c0_21, %c0_22], %36 {strides = array<i32>} : memref<1x16x256xf32, #tpu.memory_space<vmem>>, vector<1x16x256xf32>,
    return
  }
  func.func @transform_0(%arg0: i32) -> (i32, i32, i32) {
    %c0_i32 = arith.constant 0 : i32
    %c0_i32_0 = arith.constant 0 : i32
    %c0_i32_1 = arith.constant 0 : i32
    return %c0_i32, %c0_i32_0, %arg0 : i32, i32, i32
  }
  func.func @transform_1(%arg0: i32) -> (i32, i32) {
    %c0_i32 = arith.constant 0 : i32
    %c0_i32_0 = arith.constant 0 : i32
    %c0_i32_1 = arith.constant 0 : i32
    return %c0_i32, %c0_i32_0 : i32, i32
  }
  func.func @transform_2(%arg0: i32) -> (i32, i32) {
    %c0_i32 = arith.constant 0 : i32
    %c0_i32_0 = arith.constant 0 : i32
    %c0_i32_1 = arith.constant 0 : i32
    return %c0_i32, %c0_i32_0 : i32, i32
  }
  func.func @transform_3(%arg0: i32) -> (i32, i32) {
    %c0_i32 = arith.constant 0 : i32
    %c0_i32_0 = arith.constant 0 : i32
    %c0_i32_1 = arith.constant 0 : i32
    return %c0_i32, %c0_i32_0 : i32, i32
  }
  func.func @transform_4(%arg0: i32) -> (i32, i32) {
    %c0_i32 = arith.constant 0 : i32
    %c0_i32_0 = arith.constant 0 : i32
    %c0_i32_1 = arith.constant 0 : i32
    return %c0_i32, %c0_i32_0 : i32, i32
  }
  func.func @transform_5(%arg0: i32) -> (i32, i32) {
    %c0_i32 = arith.constant 0 : i32
    %c0_i32_0 = arith.constant 0 : i32
    %c0_i32_1 = arith.constant 0 : i32
    return %c0_i32, %c0_i32_0 : i32, i32
  }
  func.func @transform_6(%arg0: i32) -> (i32, i32) {
    %c0_i32 = arith.constant 0 : i32
    %c0_i32_0 = arith.constant 0 : i32
    %c0_i32_1 = arith.constant 0 : i32
    return %c0_i32, %c0_i32_0 : i32, i32
  }
  func.func @transform_7(%arg0: i32) -> (i32, i32, i32) {
    %c0_i32 = arith.constant 0 : i32
    %c0_i32_0 = arith.constant 0 : i32
    %c0_i32_1 = arith.constant 0 : i32
    return %arg0, %c0_i32, %c0_i32_0 : i32, i32, i32
  }
}

</mosaic_0001>

<llo_original>
// kernel: tpu_custom_call.1
$region0: #{tpu_custom_call.1}
  #allocation0 [shape = 'u32[]', space=smem, size = 0x4, offset = 0x4, fixed_abs, tag = 'smem constant byte address 0x4 - core index']
  #allocation1 [shape = 'u32[144,128]{1,0:T(1,128)}', space=vmem, size = 0x12000, scoped, tag = 'internal scratch']
  %s0 = inlined_call_operand.vmem [shape: f32[1,1,512], index: 0, kind: input, shape index: {}]
  %s1 = inlined_call_operand.vmem [shape: f32[64,1], index: 1, kind: input, shape index: {}]
  %s2 = inlined_call_operand.vmem [shape: f32[64,1], index: 2, kind: input, shape index: {}]
  %s3 = inlined_call_operand.vmem [shape: bf16[64,64], index: 3, kind: input, shape index: {}]
  %s4 = inlined_call_operand.vmem [shape: f32[64,1], index: 4, kind: input, shape index: {}]
  %s5 = inlined_call_operand.vmem [shape: bf16[16,64], index: 5, kind: input, shape index: {}]
  %s6 = inlined_call_operand.vmem [shape: f32[16,1], index: 6, kind: input, shape index: {}]
  %s7 = inlined_call_operand.hbm [shape: f32[2,16,256], index: 7, kind: output, shape index: {}]
  %s8 = sld [smem:[#allocation0]]
  $region61: #{tpu_custom_call.1} parent=0
    _
  %s10 = ssub.s32 1, %s8
  %s11 = scalar_select 0, %s10, %s8
  $region1: #{tpu_custom_call.1} parent=0
    #allocation2 [shape = 'u8[32768]{0}', space=vmem, size = 0x8000, scoped, tag = 'output window, operand 0']
    #allocation3 [shape = 's32[2]{0}', space=sflag, size = 0x8, scoped, tag = 'scoped memory for tpu_custom_call.1']
    %12 = vsyncpa [#allocation3], 0
    %s13 = scalar_lea.sflag [#allocation3], 1
    %14 = vsyncpa %s13, 0
    loop: start=0, step=1, limit=4
    $region2: #{tpu_custom_call.1} parent=1 // loop_pre_header
      _
    $region3: #{tpu_custom_call.1} parent=1 // loop_header
      %s16 = sphi 0, %s20
      %p17 = scmp.ge.s32.totalorder %s16, 4
      %s26 = sphi 0, %s28
      %s29 = sphi 0, %s26
      %s30 = sphi 0, %s29
      %s46 = sphi 0, %s30
      %s50 = sphi 0, %s50
      %s52 = sphi 0, %s50
      %s53 = sphi 0, %s52
      %s67 = sphi 0, %s53
      %s71 = sphi 0, %s71
      %s73 = sphi 0, %s71
      %s74 = sphi 0, %s73
      %s88 = sphi 0, %s74
      %s92 = sphi 0, %s92
      %s94 = sphi 0, %s92
      %s95 = sphi 0, %s94
      %s109 = sphi 0, %s95
      %s113 = sphi 0, %s113
      %s115 = sphi 0, %s113
      %s116 = sphi 0, %s115
      %s130 = sphi 0, %s116
      %s134 = sphi 0, %s134
      %s136 = sphi 0, %s134
      %s137 = sphi 0, %s136
      %s151 = sphi 0, %s137
      %s155 = sphi 0, %s155
      %s157 = sphi 0, %s155
      %s158 = sphi 0, %s157
      %s172 = sphi 0, %s158
      %s178 = sphi 0, %s180
      %s181 = sphi 0, %s178
      %s182 = sphi 0, %s181
      %s198 = sphi 0, %s182
    $region4: #{tpu_custom_call.1} parent=1 // loop_header_branch
      %19 = sbr.rel (%p17) target = $region8
    $region5: #{tpu_custom_call.1} parent=1 // loop_body
      %s21 = ssub.s32 %s16, 1
      %s22 = ssub.s32 %s16, 2
      %s23 = sadd.s32 %s16, 1
      %s24 = ssub.s32 %s16, %s23
      %p25 = scmp.eq.s32.totalorder %s24, 0
      %s27 = sadd.s32 %s26, 1
      %s28 = scalar_select %p25, %s26, %s27
      %p31 = pneg %p25
      %p32 = scmp.eq.s32.totalorder %s16, 1
      %p33 = por %p31, %p32
      %p34 = scmp.ne.s32.totalorder %s26, %s29
      %p35 = scmp.eq.s32.totalorder %s16, 0
      %p36 = por %p34, %p35
      %p37 = scmp.ne.s32.totalorder %s26, %s29
      %p38 = scmp.eq.s32.totalorder %s21, 1
      %p39 = por %p37, %p38
      %p40 = scmp.ne.s32.totalorder %s29, %s30
      %p41 = scmp.eq.s32.totalorder %s21, 0
      %p42 = por %p40, %p41
      %p43 = scmp.ne.s32.totalorder %s29, %s30
      %p44 = scmp.eq.s32.totalorder %s22, 1
      %p45 = por %p43, %p44
      %p47 = scmp.ne.s32.totalorder %s30, %s46
      %p48 = scmp.eq.s32.totalorder %s22, 0
      %p49 = por %p47, %p48
      %s51 = sadd.s32 %s50, 1
      %p54 = scmp.eq.s32.totalorder %s16, 1
      %p55 = scmp.ne.s32.totalorder %s50, %s52
      %p56 = scmp.eq.s32.totalorder %s16, 0
      %p57 = por %p55, %p56
      %p58 = scmp.ne.s32.totalorder %s50, %s52
      %p59 = scmp.eq.s32.totalorder %s21, 1
      %p60 = por %p58, %p59
      %p61 = scmp.ne.s32.totalorder %s52, %s53
      %p62 = scmp.eq.s32.totalorder %s21, 0
      %p63 = por %p61, %p62
      %p64 = scmp.ne.s32.totalorder %s52, %s53
      %p65 = scmp.eq.s32.totalorder %s22, 1
      %p66 = por %p64, %p65
      %p68 = scmp.ne.s32.totalorder %s53, %s67
      %p69 = scmp.eq.s32.totalorder %s22, 0
      %p70 = por %p68, %p69
      %s72 = sadd.s32 %s71, 1
      %p75 = scmp.eq.s32.totalorder %s16, 1
      %p76 = scmp.ne.s32.totalorder %s71, %s73
      %p77 = scmp.eq.s32.totalorder %s16, 0
      %p78 = por %p76, %p77
      %p79 = scmp.ne.s32.totalorder %s71, %s73
      %p80 = scmp.eq.s32.totalorder %s21, 1
      %p81 = por %p79, %p80
      %p82 = scmp.ne.s32.totalorder %s73, %s74
      %p83 = scmp.eq.s32.totalorder %s21, 0
      %p84 = por %p82, %p83
      %p85 = scmp.ne.s32.totalorder %s73, %s74
      %p86 = scmp.eq.s32.totalorder %s22, 1
      %p87 = por %p85, %p86
      %p89 = scmp.ne.s32.totalorder %s74, %s88
      %p90 = scmp.eq.s32.totalorder %s22, 0
      %p91 = por %p89, %p90
      %s93 = sadd.s32 %s92, 1
      %p96 = scmp.eq.s32.totalorder %s16, 1
      %p97 = scmp.ne.s32.totalorder %s92, %s94
      %p98 = scmp.eq.s32.totalorder %s16, 0
      %p99 = por %p97, %p98
      %p100 = scmp.ne.s32.totalorder %s92, %s94
      %p101 = scmp.eq.s32.totalorder %s21, 1
      %p102 = por %p100, %p101
      %p103 = scmp.ne.s32.totalorder %s94, %s95
      %p104 = scmp.eq.s32.totalorder %s21, 0
      %p105 = por %p103, %p104
      %p106 = scmp.ne.s32.totalorder %s94, %s95
      %p107 = scmp.eq.s32.totalorder %s22, 1
      %p108 = por %p106, %p107
      %p110 = scmp.ne.s32.totalorder %s95, %s109
      %p111 = scmp.eq.s32.totalorder %s22, 0
      %p112 = por %p110, %p111
      %s114 = sadd.s32 %s113, 1
      %p117 = scmp.eq.s32.totalorder %s16, 1
      %p118 = scmp.ne.s32.totalorder %s113, %s115
      %p119 = scmp.eq.s32.totalorder %s16, 0
      %p120 = por %p118, %p119
      %p121 = scmp.ne.s32.totalorder %s113, %s115
      %p122 = scmp.eq.s32.totalorder %s21, 1
      %p123 = por %p121, %p122
      %p124 = scmp.ne.s32.totalorder %s115, %s116
      %p125 = scmp.eq.s32.totalorder %s21, 0
      %p126 = por %p124, %p125
      %p127 = scmp.ne.s32.totalorder %s115, %s116
      %p128 = scmp.eq.s32.totalorder %s22, 1
      %p129 = por %p127, %p128
      %p131 = scmp.ne.s32.totalorder %s116, %s130
      %p132 = scmp.eq.s32.totalorder %s22, 0
      %p133 = por %p131, %p132
      %s135 = sadd.s32 %s134, 1
      %p138 = scmp.eq.s32.totalorder %s16, 1
      %p139 = scmp.ne.s32.totalorder %s134, %s136
      %p140 = scmp.eq.s32.totalorder %s16, 0
      %p141 = por %p139, %p140
      %p142 = scmp.ne.s32.totalorder %s134, %s136
      %p143 = scmp.eq.s32.totalorder %s21, 1
      %p144 = por %p142, %p143
      %p145 = scmp.ne.s32.totalorder %s136, %s137
      %p146 = scmp.eq.s32.totalorder %s21, 0
      %p147 = por %p145, %p146
      %p148 = scmp.ne.s32.totalorder %s136, %s137
      %p149 = scmp.eq.s32.totalorder %s22, 1
      %p150 = por %p148, %p149
      %p152 = scmp.ne.s32.totalorder %s137, %s151
      %p153 = scmp.eq.s32.totalorder %s22, 0
      %p154 = por %p152, %p153
      %s156 = sadd.s32 %s155, 1
      %p159 = scmp.eq.s32.totalorder %s16, 1
      %p160 = scmp.ne.s32.totalorder %s155, %s157
      %p161 = scmp.eq.s32.totalorder %s16, 0
      %p162 = por %p160, %p161
      %p163 = scmp.ne.s32.totalorder %s155, %s157
      %p164 = scmp.eq.s32.totalorder %s21, 1
      %p165 = por %p163, %p164
      %p166 = scmp.ne.s32.totalorder %s157, %s158
      %p167 = scmp.eq.s32.totalorder %s21, 0
      %p168 = por %p166, %p167
      %p169 = scmp.ne.s32.totalorder %s157, %s158
      %p170 = scmp.eq.s32.totalorder %s22, 1
      %p171 = por %p169, %p170
      %p173 = scmp.ne.s32.totalorder %s158, %s172
      %p174 = scmp.eq.s32.totalorder %s22, 0
      %p175 = por %p173, %p174
      %s176 = ssub.s32 %s16, %s23
      %p177 = scmp.eq.s32.totalorder %s176, 0
      %s179 = sadd.s32 %s178, 1
      %s180 = scalar_select %p177, %s178, %s179
      %p183 = pneg %p177
      %p184 = scmp.eq.s32.totalorder %s16, 1
      %p185 = por %p183, %p184
      %p186 = scmp.ne.s32.totalorder %s178, %s181
      %p187 = scmp.eq.s32.totalorder %s16, 0
      %p188 = por %p186, %p187
      %p189 = scmp.ne.s32.totalorder %s178, %s181
      %p190 = scmp.eq.s32.totalorder %s21, 1
      %p191 = por %p189, %p190
      %p192 = scmp.ne.s32.totalorder %s181, %s182
      %p193 = scmp.eq.s32.totalorder %s21, 0
      %p194 = por %p192, %p193
      %p195 = scmp.ne.s32.totalorder %s181, %s182
      %p196 = scmp.eq.s32.totalorder %s22, 1
      %p197 = por %p195, %p196
      %p199 = scmp.ne.s32.totalorder %s182, %s198
      %p200 = scmp.eq.s32.totalorder %s22, 0
      %p201 = por %p199, %p200
      %p202 = scmp.le.s32.totalorder 1, %s16
      %p203 = scmp.lt.s32.totalorder %s16, 3
      %p204 = pnand %p202, %p203
      %p205 = pneg %p204
      // Predicated region
      $region9: #{tpu_custom_call.1} parent=5 // pred_check
        _
      $region10: #{tpu_custom_call.1} parent=5 // pred_check_branch
        %207 = sbr.rel (%p204) target = $region12
      $region11: #{tpu_custom_call.1} parent=5 // pred_region
        %s208 = ssub.s32 %s16, 1
        // Predicated region
        $region13: #{tpu_custom_call.1} parent=11 // pred_check
          %p209 = pneg %p63
        $region14: #{tpu_custom_call.1} parent=11 // pred_check_branch
          %211 = sbr.rel (%p209) target = $region16
        $region15: #{tpu_custom_call.1} parent=11 // pred_region
          _
        $region16: #{tpu_custom_call.1} parent=11 // pred_fallthru
          _
        // Predicated region
        $region17: #{tpu_custom_call.1} parent=11 // pred_check
          %p212 = pneg %p84
        $region18: #{tpu_custom_call.1} parent=11 // pred_check_branch
          %214 = sbr.rel (%p212) target = $region20
        $region19: #{tpu_custom_call.1} parent=11 // pred_region
          _
        $region20: #{tpu_custom_call.1} parent=11 // pred_fallthru
          _
        // Predicated region
        $region21: #{tpu_custom_call.1} parent=11 // pred_check
          %p215 = pneg %p105
        $region22: #{tpu_custom_call.1} parent=11 // pred_check_branch
          %217 = sbr.rel (%p215) target = $region24
        $region23: #{tpu_custom_call.1} parent=11 // pred_region
          _
        $region24: #{tpu_custom_call.1} parent=11 // pred_fallthru
          _
        // Predicated region
        $region25: #{tpu_custom_call.1} parent=11 // pred_check
          %p218 = pneg %p126
        $region26: #{tpu_custom_call.1} parent=11 // pred_check_branch
          %220 = sbr.rel (%p218) target = $region28
        $region27: #{tpu_custom_call.1} parent=11 // pred_region
          _
        $region28: #{tpu_custom_call.1} parent=11 // pred_fallthru
          _
        // Predicated region
        $region29: #{tpu_custom_call.1} parent=11 // pred_check
          %p221 = pneg %p147
        $region30: #{tpu_custom_call.1} parent=11 // pred_check_branch
          %223 = sbr.rel (%p221) target = $region32
        $region31: #{tpu_custom_call.1} parent=11 // pred_region
          _
        $region32: #{tpu_custom_call.1} parent=11 // pred_fallthru
          _
        // Predicated region
        $region33: #{tpu_custom_call.1} parent=11 // pred_check
          %p224 = pneg %p168
        $region34: #{tpu_custom_call.1} parent=11 // pred_check_branch
          %226 = sbr.rel (%p224) target = $region36
        $region35: #{tpu_custom_call.1} parent=11 // pred_region
          _
        $region36: #{tpu_custom_call.1} parent=11 // pred_fallthru
          _
      $region12: #{tpu_custom_call.1} parent=5 // pred_fallthru
        _
      %p227 = scmp.lt.s32.totalorder %s16, 2
      // Predicated region
      $region37: #{tpu_custom_call.1} parent=5 // pred_check
        %p228 = pneg %p227
      $region38: #{tpu_custom_call.1} parent=5 // pred_check_branch
        %230 = sbr.rel (%p228) target = $region40
      $region39: #{tpu_custom_call.1} parent=5 // pred_region
        // Predicated region
        $region41: #{tpu_custom_call.1} parent=39 // pred_check
          %p231 = pneg %p36
        $region42: #{tpu_custom_call.1} parent=39 // pred_check_branch
          %233 = sbr.rel (%p231) target = $region44
        $region43: #{tpu_custom_call.1} parent=39 // pred_region
          %s234 = smul.u32 2, %s16
          %p235 = scmp.lt.s32.totalorder %s234, 3
          %s236 = scalar_select %p235, %s234, 3
          %s237 = scalar_lea.vmem %s0, %s236
          %s238 = smul.u32 2, %s16
        $region44: #{tpu_custom_call.1} parent=39 // pred_fallthru
          _
      $region40: #{tpu_custom_call.1} parent=5 // pred_fallthru
        _
      %p239 = scmp.le.s32.totalorder 1, %s16
      %p240 = scmp.lt.s32.totalorder %s16, 3
      %p241 = pnand %p239, %p240
      %p242 = pneg %p241
      // Predicated region
      $region45: #{tpu_custom_call.1} parent=5 // pred_check
        _
      $region46: #{tpu_custom_call.1} parent=5 // pred_check_branch
        %244 = sbr.rel (%p241) target = $region48
      $region47: #{tpu_custom_call.1} parent=5 // pred_region
        %s245 = ssub.s32 %s16, 1
        %s246 = smul.u32 2, %s21
        %p247 = scmp.lt.s32.totalorder %s246, 3
        %s248 = scalar_select %p247, %s246, 3
        %s249 = scalar_lea.vmem %s0, %s248
        %p250 = pneg %p42
        %p251 = pneg %p39
        %p252 = pneg %p63
        %p253 = pneg %p60
        %p254 = pneg %p84
        %p255 = pneg %p81
        %p256 = pneg %p105
        %p257 = pneg %p102
        %p258 = pneg %p126
        %p259 = pneg %p123
        %p260 = pneg %p147
        %p261 = pneg %p144
        %p262 = pneg %p168
        %p263 = pneg %p165
        %p264 = pneg %p194
        %p265 = pneg %p191
        %s266 = sand.u32 %s181, 1
        %s267 = scalar_lea.sflag [#allocation3], %s266
        %s268 = sand.u32 %s181, 1
        %s269 = smul.addr %s268, 32
        %s270 = scalar_lea.vmem [#allocation2], %s269
        %s271 = smul.u32 2, %s21
        %p272 = scmp.lt.s32.totalorder %s271, 3
        %s273 = scalar_select %p272, %s271, 3
        %s274 = scalar_lea.vmem %s0, %s273
        %s275 = smul.u32 2, %s21
        %v277 = vld [vmem:[%s274] sm:$0x3]
        %v278 = vld [vmem:[%s1] sm:$0xff]
        %v279 = vld [vmem:[%s1 + $0x8] sm:$0xff]
        %v280 = vld [vmem:[%s1 + $0x10] sm:$0xff]
        %v281 = vld [vmem:[%s1 + $0x18] sm:$0xff]
        %v282 = vld [vmem:[%s1 + $0x20] sm:$0xff]
        %v283 = vld [vmem:[%s1 + $0x28] sm:$0xff]
        %v284 = vld [vmem:[%s1 + $0x30] sm:$0xff]
        %v285 = vld [vmem:[%s1 + $0x38] sm:$0xff]
        %v286 = vld [vmem:[%s2] sm:$0xff]
        %v287 = vld [vmem:[%s2 + $0x8] sm:$0xff]
        %v288 = vld [vmem:[%s2 + $0x10] sm:$0xff]
        %v289 = vld [vmem:[%s2 + $0x18] sm:$0xff]
        %v290 = vld [vmem:[%s2 + $0x20] sm:$0xff]
        %v291 = vld [vmem:[%s2 + $0x28] sm:$0xff]
        %v292 = vld [vmem:[%s2 + $0x30] sm:$0xff]
        %v293 = vld [vmem:[%s2 + $0x38] sm:$0xff]
        %v294 = vld [vmem:[%s3] sm:$0xf]
        %v295 = vld [vmem:[%s3 + $0x4] sm:$0xf]
        %v296 = vld [vmem:[%s3 + $0x8] sm:$0xf]
        %v297 = vld [vmem:[%s3 + $0xc] sm:$0xf]
        %v298 = vld [vmem:[%s3 + $0x10] sm:$0xf]
        %v299 = vld [vmem:[%s3 + $0x14] sm:$0xf]
        %v300 = vld [vmem:[%s3 + $0x18] sm:$0xf]
        %v301 = vld [vmem:[%s3 + $0x1c] sm:$0xf]
        %v302 = vld [vmem:[%s4] sm:$0xff]
        %v303 = vld [vmem:[%s4 + $0x8] sm:$0xff]
        %v304 = vld [vmem:[%s4 + $0x10] sm:$0xff]
        %v305 = vld [vmem:[%s4 + $0x18] sm:$0xff]
        %v306 = vld [vmem:[%s4 + $0x20] sm:$0xff]
        %v307 = vld [vmem:[%s4 + $0x28] sm:$0xff]
        %v308 = vld [vmem:[%s4 + $0x30] sm:$0xff]
        %v309 = vld [vmem:[%s4 + $0x38] sm:$0xff]
        %v310 = vld [vmem:[%s5] sm:$0xf]
        %v311 = vld [vmem:[%s5 + $0x4] sm:$0xf]
        %v312 = vld [vmem:[%s6] sm:$0xff]
        %v313 = vld [vmem:[%s6 + $0x8] sm:$0xff]
        %315 = vset.pattern.permute.xlu0 0
        %316 = vperm.xlu0 %315, %v278
        %v317 = vpop.permute.xlu0 %316
        %320 = vset.pattern.permute.xlu0 0
        %321 = vperm.xlu0 %320, %v279
        %v322 = vpop.permute.xlu0 %321
        %325 = vset.pattern.permute.xlu0 0
        %326 = vperm.xlu0 %325, %v280
        %v327 = vpop.permute.xlu0 %326
        %330 = vset.pattern.permute.xlu0 0
        %331 = vperm.xlu0 %330, %v281
        %v332 = vpop.permute.xlu0 %331
        %335 = vset.pattern.permute.xlu0 0
        %336 = vperm.xlu0 %335, %v282
        %v337 = vpop.permute.xlu0 %336
        %340 = vset.pattern.permute.xlu0 0
        %341 = vperm.xlu0 %340, %v283
        %v342 = vpop.permute.xlu0 %341
        %345 = vset.pattern.permute.xlu0 0
        %346 = vperm.xlu0 %345, %v284
        %v347 = vpop.permute.xlu0 %346
        %350 = vset.pattern.permute.xlu0 0
        %351 = vperm.xlu0 %350, %v285
        %v352 = vpop.permute.xlu0 %351
        %v355 = vlaneseq
        %v356 = vshrl.u32 %v355, 7
        %v357 = vsub.s32 0, %v356
        %v358 = vrot.slane %v277, %v357
        %v359 = vlaneseq
        %v360 = vshrl.u32 %v359, 7
        %v361 = vsub.s32 1, %v360
        %v362 = vrot.slane %v277, %v361
        %v365 = vmul.f32 %v317, %v358
        %v366 = vmul.f32 %v317, %v362
        %v367 = vmul.f32 %v322, %v358
        %v368 = vmul.f32 %v322, %v362
        %v369 = vmul.f32 %v327, %v358
        %v370 = vmul.f32 %v327, %v362
        %v371 = vmul.f32 %v332, %v358
        %v372 = vmul.f32 %v332, %v362
        %v373 = vmul.f32 %v337, %v358
        %v374 = vmul.f32 %v337, %v362
        %v375 = vmul.f32 %v342, %v358
        %v376 = vmul.f32 %v342, %v362
        %v377 = vmul.f32 %v347, %v358
        %v378 = vmul.f32 %v347, %v362
        %v379 = vmul.f32 %v352, %v358
        %v380 = vmul.f32 %v352, %v362
        %382 = vset.pattern.permute.xlu0 0
        %383 = vperm.xlu0 %382, %v286
        %v384 = vpop.permute.xlu0 %383
        %387 = vset.pattern.permute.xlu0 0
        %388 = vperm.xlu0 %387, %v287
        %v389 = vpop.permute.xlu0 %388
        %392 = vset.pattern.permute.xlu0 0
        %393 = vperm.xlu0 %392, %v288
        %v394 = vpop.permute.xlu0 %393
        %397 = vset.pattern.permute.xlu0 0
        %398 = vperm.xlu0 %397, %v289
        %v399 = vpop.permute.xlu0 %398
        %402 = vset.pattern.permute.xlu0 0
        %403 = vperm.xlu0 %402, %v290
        %v404 = vpop.permute.xlu0 %403
        %407 = vset.pattern.permute.xlu0 0
        %408 = vperm.xlu0 %407, %v291
        %v409 = vpop.permute.xlu0 %408
        %412 = vset.pattern.permute.xlu0 0
        %413 = vperm.xlu0 %412, %v292
        %v414 = vpop.permute.xlu0 %413
        %417 = vset.pattern.permute.xlu0 0
        %418 = vperm.xlu0 %417, %v293
        %v419 = vpop.permute.xlu0 %418
        %v421 = vadd.f32 %v365, %v384
        %v422 = vadd.f32 %v366, %v384
        %v423 = vadd.f32 %v367, %v389
        %v424 = vadd.f32 %v368, %v389
        %v425 = vadd.f32 %v369, %v394
        %v426 = vadd.f32 %v370, %v394
        %v427 = vadd.f32 %v371, %v399
        %v428 = vadd.f32 %v372, %v399
        %v429 = vadd.f32 %v373, %v404
        %v430 = vadd.f32 %v374, %v404
        %v431 = vadd.f32 %v375, %v409
        %v432 = vadd.f32 %v376, %v409
        %v433 = vadd.f32 %v377, %v414
        %v434 = vadd.f32 %v378, %v414
        %v435 = vadd.f32 %v379, %v419
        %v436 = vadd.f32 %v380, %v419
        %v437 = vmax.f32 %v421, 0.0
        %v438 = vmax.f32 %v422, 0.0
        %v439 = vmax.f32 %v423, 0.0
        %v440 = vmax.f32 %v424, 0.0
        %v441 = vmax.f32 %v425, 0.0
        %v442 = vmax.f32 %v426, 0.0
        %v443 = vmax.f32 %v427, 0.0
        %v444 = vmax.f32 %v428, 0.0
        %v445 = vmax.f32 %v429, 0.0
        %v446 = vmax.f32 %v430, 0.0
        %v447 = vmax.f32 %v431, 0.0
        %v448 = vmax.f32 %v432, 0.0
        %v449 = vmax.f32 %v433, 0.0
        %v450 = vmax.f32 %v434, 0.0
        %v451 = vmax.f32 %v435, 0.0
        %v452 = vmax.f32 %v436, 0.0
        %v453 = vpack.c.bf16 %v439, %v437
        %v454 = vpack.c.bf16 %v440, %v438
        %v455 = vpack.c.bf16 %v443, %v441
        %v456 = vpack.c.bf16 %v444, %v442
        %v457 = vpack.c.bf16 %v447, %v445
        %v458 = vpack.c.bf16 %v448, %v446
        %v459 = vpack.c.bf16 %v451, %v449
        %v460 = vpack.c.bf16 %v452, %v450
        %462 = vset.pattern.permute.xlu0 0
        %463 = vperm.xlu0 %462, %v302
        %v464 = vpop.permute.xlu0 %463
        %467 = vset.pattern.permute.xlu0 0
        %468 = vperm.xlu0 %467, %v303
        %v469 = vpop.permute.xlu0 %468
        %472 = vset.pattern.permute.xlu0 0
        %473 = vperm.xlu0 %472, %v304
        %v474 = vpop.permute.xlu0 %473
        %477 = vset.pattern.permute.xlu0 0
        %478 = vperm.xlu0 %477, %v305
        %v479 = vpop.permute.xlu0 %478
        %482 = vset.pattern.permute.xlu0 0
        %483 = vperm.xlu0 %482, %v306
        %v484 = vpop.permute.xlu0 %483
        %487 = vset.pattern.permute.xlu0 0
        %488 = vperm.xlu0 %487, %v307
        %v489 = vpop.permute.xlu0 %488
        %492 = vset.pattern.permute.xlu0 0
        %493 = vperm.xlu0 %492, %v308
        %v494 = vpop.permute.xlu0 %493
        %497 = vset.pattern.permute.xlu0 0
        %498 = vperm.xlu0 %497, %v309
        %v499 = vpop.permute.xlu0 %498
        %v509 = vunpack.c.l.b16 %v294
        %v510 = vunpack.c.l.b16 %v295
        %v511 = vunpack.c.l.b16 %v296
        %v512 = vunpack.c.l.b16 %v297
        %v513 = vunpack.c.l.b16 %v298
        %v514 = vunpack.c.l.b16 %v299
        %v515 = vunpack.c.l.b16 %v300
        %v516 = vunpack.c.l.b16 %v301
        %v517 = vpack.c.b16 %v510, %v509
        %v518 = vpack.c.b16 %v512, %v511
        %v519 = vpack.c.b16 %v514, %v513
        %v520 = vpack.c.b16 %v516, %v515
        %vm521 = vcmask 523264
        %v523 = vsel %vm521, %v517, 0
        %v526 = vsel %vm521, %v518, 0
        %v529 = vsel %vm521, %v519, 0
        %v532 = vsel %vm521, %v520, 0
        %534 = vmatprep.subr.bf16.mxu0 0
        %535 = vmatpush1.bf16.msra.mxu0 0
        %536 = vmatprep.subr.bf16.mxu0 0
        %537 = vmatpush1.bf16.msra.mxu0 0
        %538 = vmatprep.subr.bf16.mxu0 0
        %539 = vmatpush1.bf16.msra.mxu0 0
        %540 = vmatprep.subr.bf16.mxu0 0
        %541 = vmatpush1.bf16.msra.mxu0 0
        %542 = vmatprep.subr.bf16.mxu0 %v460
        %543 = vmatpush1.bf16.msra.mxu0 %v459
        %544 = vmatprep.subr.bf16.mxu0 %v458
        %545 = vmatpush1.bf16.msra.mxu0 %v457
        %546 = vmatprep.subr.bf16.mxu0 %v456
        %547 = vmatpush1.bf16.msra.mxu0 %v455
        %548 = vmatprep.subr.bf16.mxu0 %v454
        %549 = vmatpush1.bf16.msra.mxu0 %v453
        %550 = vmatprep.subr.bf16.mxu0 0
        %551 = vmatpush2.bf16.msra.mxu0 0
        %552 = vmatprep.subr.bf16.mxu0 0
        %553 = vmatpush2.bf16.msra.mxu0 0
        %554 = vmatprep.subr.bf16.mxu0 0
        %555 = vmatpush2.bf16.msra.mxu0 0
        %556 = vmatprep.subr.bf16.mxu0 0
        %557 = vmatpush2.bf16.msra.mxu0 0
        %558 = vmatprep.subr.bf16.mxu0 0
        %559 = vmatpush2.bf16.msra.mxu0 0
        %560 = vmatprep.subr.bf16.mxu0 0
        %561 = vmatpush2.bf16.msra.mxu0 0
        %562 = vmatprep.subr.bf16.mxu0 0
        %563 = vmatpush2.bf16.msra.mxu0 0
        %564 = vmatprep.subr.bf16.mxu0 0
        %565 = vmatpush2.bf16.msra.mxu0 0
        %566 = vmatprep.mubr.bf16.mxu0 0
        %567 = vmatmul.mubr.bf16.gmra.mxu0 %v523
        %v568 = vpop.f32.mrf.mxu0
        %v569 = vadd.f32 %v464, %v568
        %v570 = vpop.f32.mrf.mxu0
        %v571 = vadd.f32 %v464, %v570
        %v572 = vpop.f32.mrf.mxu0
        %v573 = vadd.f32 %v469, %v572
        %v574 = vpop.f32.mrf.mxu0
        %v575 = vadd.f32 %v469, %v574
        %576 = vmatprep.mubr.bf16.mxu0 0
        %577 = vmatmul.mubr.bf16.gmra.mxu0 %v526
        %v578 = vpop.f32.mrf.mxu0
        %v579 = vadd.f32 %v474, %v578
        %v580 = vpop.f32.mrf.mxu0
        %v581 = vadd.f32 %v474, %v580
        %v582 = vpop.f32.mrf.mxu0
        %v583 = vadd.f32 %v479, %v582
        %v584 = vpop.f32.mrf.mxu0
        %v585 = vadd.f32 %v479, %v584
        %586 = vmatprep.mubr.bf16.mxu0 0
        %587 = vmatmul.mubr.bf16.gmra.mxu0 %v529
        %v588 = vpop.f32.mrf.mxu0
        %v589 = vadd.f32 %v484, %v588
        %v590 = vpop.f32.mrf.mxu0
        %v591 = vadd.f32 %v484, %v590
        %v592 = vpop.f32.mrf.mxu0
        %v593 = vadd.f32 %v489, %v592
        %v594 = vpop.f32.mrf.mxu0
        %v595 = vadd.f32 %v489, %v594
        %596 = vmatprep.mubr.bf16.mxu0 0
        %597 = vmatmul.mubr.bf16.gmra.mxu0 %v532
        %v598 = vpop.f32.mrf.mxu0
        %v599 = vadd.f32 %v494, %v598
        %v600 = vpop.f32.mrf.mxu0
        %v601 = vadd.f32 %v494, %v600
        %v602 = vpop.f32.mrf.mxu0
        %v603 = vadd.f32 %v499, %v602
        %v604 = vpop.f32.mrf.mxu0
        %v605 = vadd.f32 %v499, %v604
        %606 = vdwg.mxu0
        %v607 = vmax.f32 %v569, 0.0
        %v608 = vmax.f32 %v571, 0.0
        %v609 = vmax.f32 %v573, 0.0
        %v610 = vmax.f32 %v575, 0.0
        %v611 = vmax.f32 %v579, 0.0
        %v612 = vmax.f32 %v581, 0.0
        %v613 = vmax.f32 %v583, 0.0
        %v614 = vmax.f32 %v585, 0.0
        %v615 = vmax.f32 %v589, 0.0
        %v616 = vmax.f32 %v591, 0.0
        %v617 = vmax.f32 %v593, 0.0
        %v618 = vmax.f32 %v595, 0.0
        %v619 = vmax.f32 %v599, 0.0
        %v620 = vmax.f32 %v601, 0.0
        %v621 = vmax.f32 %v603, 0.0
        %v622 = vmax.f32 %v605, 0.0
        %v623 = vpack.c.bf16 %v609, %v607
        %v624 = vpack.c.bf16 %v610, %v608
        %v625 = vpack.c.bf16 %v613, %v611
        %v626 = vpack.c.bf16 %v614, %v612
        %v627 = vpack.c.bf16 %v617, %v615
        %v628 = vpack.c.bf16 %v618, %v616
        %v629 = vpack.c.bf16 %v621, %v619
        %v630 = vpack.c.bf16 %v622, %v620
        %632 = vset.pattern.permute.xlu0 0
        %633 = vperm.xlu0 %632, %v312
        %v634 = vpop.permute.xlu0 %633
        %637 = vset.pattern.permute.xlu0 0
        %638 = vperm.xlu0 %637, %v313
        %v639 = vpop.permute.xlu0 %638
        %v643 = vunpack.c.l.b16 %v310
        %v644 = vunpack.c.l.b16 %v311
        %v645 = vpack.c.b16 %v644, %v643
        %v647 = vsel %vm521, %v645, 0
        %649 = vmatprep.subr.bf16.mxu0 0
        %650 = vmatpush1.bf16.msra.mxu0 0
        %651 = vmatprep.subr.bf16.mxu0 0
        %652 = vmatpush1.bf16.msra.mxu0 0
        %653 = vmatprep.subr.bf16.mxu0 0
        %654 = vmatpush1.bf16.msra.mxu0 0
        %655 = vmatprep.subr.bf16.mxu0 0
        %656 = vmatpush1.bf16.msra.mxu0 0
        %657 = vmatprep.subr.bf16.mxu0 %v630
        %658 = vmatpush1.bf16.msra.mxu0 %v629
        %659 = vmatprep.subr.bf16.mxu0 %v628
        %660 = vmatpush1.bf16.msra.mxu0 %v627
        %661 = vmatprep.subr.bf16.mxu0 %v626
        %662 = vmatpush1.bf16.msra.mxu0 %v625
        %663 = vmatprep.subr.bf16.mxu0 %v624
        %664 = vmatpush1.bf16.msra.mxu0 %v623
        %665 = vmatprep.subr.bf16.mxu0 0
        %666 = vmatpush2.bf16.msra.mxu0 0
        %667 = vmatprep.subr.bf16.mxu0 0
        %668 = vmatpush2.bf16.msra.mxu0 0
        %669 = vmatprep.subr.bf16.mxu0 0
        %670 = vmatpush2.bf16.msra.mxu0 0
        %671 = vmatprep.subr.bf16.mxu0 0
        %672 = vmatpush2.bf16.msra.mxu0 0
        %673 = vmatprep.subr.bf16.mxu0 0
        %674 = vmatpush2.bf16.msra.mxu0 0
        %675 = vmatprep.subr.bf16.mxu0 0
        %676 = vmatpush2.bf16.msra.mxu0 0
        %677 = vmatprep.subr.bf16.mxu0 0
        %678 = vmatpush2.bf16.msra.mxu0 0
        %679 = vmatprep.subr.bf16.mxu0 0
        %680 = vmatpush2.bf16.msra.mxu0 0
        %681 = vmatprep.mubr.bf16.mxu0 0
        %682 = vmatmul.mubr.bf16.gmra.mxu0 %v647
        %v683 = vpop.f32.mrf.mxu0
        %v684 = vadd.f32 %v634, %v683
        %v685 = vpop.f32.mrf.mxu0
        %v686 = vadd.f32 %v634, %v685
        %v687 = vpop.f32.mrf.mxu0
        %v688 = vadd.f32 %v639, %v687
        %v689 = vpop.f32.mrf.mxu0
        %v690 = vadd.f32 %v639, %v689
        %691 = vdwg.mxu0
        %vm692 = vcmp.gt.f32.partialorder %v684, 20.0
        %vm693 = vcmp.gt.f32.partialorder %v686, 20.0
        %vm694 = vcmp.gt.f32.partialorder %v688, 20.0
        %vm695 = vcmp.gt.f32.partialorder %v690, 20.0
        %v696 = vmin.f32 %v684, 20.0
        %v697 = vmin.f32 %v686, 20.0
        %v698 = vmin.f32 %v688, 20.0
        %v699 = vmin.f32 %v690, 20.0
        %v700 = vmul.f32 %v696, 1.442695
        %v701 = vpow.pop %v700
        %v702 = vmul.f32 %v697, 1.442695
        %v703 = vpow.pop %v702
        %v704 = vmul.f32 %v698, 1.442695
        %v705 = vpow.pop %v704
        %v706 = vmul.f32 %v699, 1.442695
        %v707 = vpow.pop %v706
        %v708 = vadd.f32 %v701, 1.0
        %v709 = vlog2.pop %v708
        %v710 = vmul.f32 %v709, 0.6931472
        %v711 = vmul.f32 -0.5, %v701
        %v712 = vadd.f32 %v711, 1.0
        %v713 = vmul.f32 %v712, %v701
        %v714 = vand.u32 2147483647, %v701
        %vm715 = vcmp.lt.f32.partialorder %v714, 0.0004427343
        %v716 = vsel %vm715, %v713, %v710
        %v717 = vadd.f32 %v703, 1.0
        %v718 = vlog2.pop %v717
        %v719 = vmul.f32 %v718, 0.6931472
        %v720 = vmul.f32 -0.5, %v703
        %v721 = vadd.f32 %v720, 1.0
        %v722 = vmul.f32 %v721, %v703
        %v723 = vand.u32 2147483647, %v703
        %vm724 = vcmp.lt.f32.partialorder %v723, 0.0004427343
        %v725 = vsel %vm724, %v722, %v719
        %v726 = vadd.f32 %v705, 1.0
        %v727 = vlog2.pop %v726
        %v728 = vmul.f32 %v727, 0.6931472
        %v729 = vmul.f32 -0.5, %v705
        %v730 = vadd.f32 %v729, 1.0
        %v731 = vmul.f32 %v730, %v705
        %v732 = vand.u32 2147483647, %v705
        %vm733 = vcmp.lt.f32.partialorder %v732, 0.0004427343
        %v734 = vsel %vm733, %v731, %v728
        %v735 = vadd.f32 %v707, 1.0
        %v736 = vlog2.pop %v735
        %v737 = vmul.f32 %v736, 0.6931472
        %v738 = vmul.f32 -0.5, %v707
        %v739 = vadd.f32 %v738, 1.0
        %v740 = vmul.f32 %v739, %v707
        %v741 = vand.u32 2147483647, %v707
        %vm742 = vcmp.lt.f32.partialorder %v741, 0.0004427343
        %v743 = vsel %vm742, %v740, %v737
        %v744 = vsel %vm692, %v684, %v716
        %v745 = vsel %vm693, %v686, %v725
        %v746 = vsel %vm694, %v688, %v734
        %v747 = vsel %vm695, %v690, %v743
        %v748 = vadd.f32 %v744, 1e-06
        %v749 = vadd.f32 %v745, 1e-06
        %v750 = vadd.f32 %v746, 1e-06
        %v751 = vadd.f32 %v747, 1e-06
        %752 = vst [vmem:[%s270] sm:$0xff] %v748
        %753 = vst [vmem:[%s270 + $0x8] sm:$0xff] %v749
        %754 = vst [vmem:[%s270 + $0x10] sm:$0xff] %v750
        %755 = vst [vmem:[%s270 + $0x18] sm:$0xff] %v751
        %s756 = sand.u32 %s181, 1
        %s757 = scalar_lea.sflag [#allocation3], %s756
        %s758 = sand.u32 %s181, 1
        %s759 = smul.addr %s758, 32
        %s760 = scalar_lea.vmem [#allocation2], %s759
        // Predicated region
        $region49: #{tpu_custom_call.1} parent=47 // pred_check
          %p761 = pneg %p191
        $region50: #{tpu_custom_call.1} parent=47 // pred_check_branch
          %763 = sbr.rel (%p761) target = $region52
        $region51: #{tpu_custom_call.1} parent=47 // pred_region
          %s765 = ssub.s32 512, 512
          %766 = vsyncadd %s757, %s765
          %s767 = smul.addr %s21, 4
          %s768 = smul.addr %s767, 128
          %s769 = scalar_lea.hbm %s7, %s768
          %s770 = sshll.u32 %s760, 4
          %s771 = int_to_ptr.vmem [resolvable:$true] %s770
          %776 = dma.vmem_to_hbm [thread:$0]  %s771, 512, %s769, %s757, 256, 256, 16
        $region52: #{tpu_custom_call.1} parent=47 // pred_fallthru
          _
      $region48: #{tpu_custom_call.1} parent=5 // pred_fallthru
        _
      %p777 = scmp.le.s32.totalorder 2, %s16
      // Predicated region
      $region53: #{tpu_custom_call.1} parent=5 // pred_check
        %p778 = pneg %p777
      $region54: #{tpu_custom_call.1} parent=5 // pred_check_branch
        %780 = sbr.rel (%p778) target = $region56
      $region55: #{tpu_custom_call.1} parent=5 // pred_region
        %s781 = ssub.s32 %s16, 2
        // Predicated region
        $region57: #{tpu_custom_call.1} parent=55 // pred_check
          %p782 = pneg %p197
        $region58: #{tpu_custom_call.1} parent=55 // pred_check_branch
          %784 = sbr.rel (%p782) target = $region60
        $region59: #{tpu_custom_call.1} parent=55 // pred_region
          %s785 = sand.u32 %s182, 1
          %s786 = scalar_lea.sflag [#allocation3], %s785
          %s787 = sand.u32 %s182, 1
          %s788 = smul.addr %s787, 32
          %s789 = scalar_lea.vmem [#allocation2], %s788
          %790 = dma.done %s786, 512
        $region60: #{tpu_custom_call.1} parent=55 // pred_fallthru
          _
      $region56: #{tpu_custom_call.1} parent=5 // pred_fallthru
        _
    $region6: #{tpu_custom_call.1} parent=1 // loop_footer
      %s20 = sadd.s32 1, %s16
    $region7: #{tpu_custom_call.1} parent=1 // loop_footer_branch
      %15 = sbr.rel target = $region3
    $region8: #{tpu_custom_call.1} parent=1 // loop_exit
      _
    %791 = vsyncpa [#allocation3], 1
    %s792 = scalar_lea.sflag [#allocation3], 1
    %793 = vsyncpa %s792, 1

</llo_original>
